<compile_context>
chip_gen: v6e
topology: v6e:2x2x1
jax: 0.10.0
libtpu: 0.0.40
codegen_flags: <defaults>
</compile_context>

<pallas_src>
import numpy as np
import jax
import jax.numpy as jnp
from jax.experimental import pallas as pl
from jax.experimental.pallas import tpu as pltpu


# ----------------------------------------------------------------------------
# Pallas kernel: one (H, W) image per grid step (batch dim squeezed away).
# ----------------------------------------------------------------------------
def _contour_loss_kernel(x_ref, dmap_ref, contour_ref, diffable_ref, psum_ref):
    x = x_ref[...]        # (H, W) rendered image
    dm = dmap_ref[...]    # (H, W) reference distance map
    h, w = x_ref.shape

    # img_render_diffable = sigmoid(100 * (x - 0.1))   (EUP exp + VPU)
    d = 1.0 / (1.0 + jnp.exp(-100.0 * (x - 0.1)))
    # NOTE: the torch reference also builds `img_render_mask = d * (d < 0.1)`,
    # which is dead code (never used afterwards); omitted here on purpose.

    # 3x3 Laplacian conv (kernel [[0,1,0],[1,-4,1],[0,1,0]], zero padding=1)
    # built from static XLU rolls + border masks (Mosaic has no conv op).
    # pltpu.roll(d, s, axis)[i] == d[(i - s) mod n], so:
    row = jax.lax.broadcasted_iota(jnp.int32, (h, w), 0)
    col = jax.lax.broadcasted_iota(jnp.int32, (h, w), 1)
    up    = jnp.where(row == 0,     0.0, pltpu.roll(d, 1,     axis=0))  # d[i-1, j]
    down  = jnp.where(row == h - 1, 0.0, pltpu.roll(d, h - 1, axis=0))  # d[i+1, j]
    left  = jnp.where(col == 0,     0.0, pltpu.roll(d, 1,     axis=1))  # d[i, j-1]
    right = jnp.where(col == w - 1, 0.0, pltpu.roll(d, w - 1, axis=1))  # d[i, j+1]
    contours = up + down + left + right - 4.0 * d
    contours = jnp.clip(contours, 0.0, 255.0)
    contour = jnp.tanh(contours)                                        # EUP

    contour_ref[...] = contour
    diffable_ref[...] = d

    # Per-batch partial sum of contour * dist_map, stored lane-dense so the
    # epilogue is one unmasked (8, 128) store instead of a masked (1, 1) vst.
    partial = jnp.sum(contour * dm, axis=1, keepdims=True)   # (H, 1)  XLU reduce
    total = jnp.sum(partial, axis=0, keepdims=True)          # (1, 1)
    psum_ref[...] = jnp.broadcast_to(total, psum_ref.shape)  # (8, 128)


# ----------------------------------------------------------------------------
# Wrapper
# ----------------------------------------------------------------------------
@jax.jit
def contour_loss_pallas(img_render_original, img_ref_dist_map):
    """Fused ContourLoss forward. Accepts (H, W) or (B, H, W) float inputs."""
    x = jnp.asarray(img_render_original, jnp.float32)
    dm = jnp.asarray(img_ref_dist_map, jnp.float32)
    squeeze_batch = False
    if x.ndim == 2:
        x, dm = x[None], dm[None]
        squeeze_batch = True
    b, h, w = x.shape

    contour, diffable, psum = pl.pallas_call(
        _contour_loss_kernel,
        out_shape=(jax.ShapeDtypeStruct((b, h, w), jnp.float32),
                   jax.ShapeDtypeStruct((b, h, w), jnp.float32),
                   jax.ShapeDtypeStruct((b, 8, 128), jnp.float32)),
        grid=(b,),
        in_specs=[pl.BlockSpec((None, h, w), lambda i: (i, 0, 0)),
                  pl.BlockSpec((None, h, w), lambda i: (i, 0, 0))],
        out_specs=(pl.BlockSpec((None, h, w), lambda i: (i, 0, 0)),
                   pl.BlockSpec((None, h, w), lambda i: (i, 0, 0)),
                   pl.BlockSpec((None, 8, 128), lambda i: (i, 0, 0))),
        compiler_params=pltpu.CompilerParams(
            dimension_semantics=("parallel",)),
    )(x, dm)

    dist = jnp.sum(psum[:, 0, 0])        # finish the tiny reduction on-device
    if squeeze_batch:
        contour, diffable = contour[0], diffable[0]
    return dist, contour, diffable


class ContourLoss:
    """JAX/Pallas mirror of the PyTorch ContourLoss module."""

    def __init__(self, device=None):
        self.device = device  # kept for API parity; unused with JAX/TPU

    def forward(self, img_render_original, img_ref, img_ref_dist_map):
        del img_ref  # present in the torch API but unused by the loss math
        dist, contour, diffable = contour_loss_pallas(
            img_render_original, img_ref_dist_map)
        # TODO(synk): torch's `assert dist >= 0` would force a device->host
        # sync per call; it is checked in the test harness instead.
        return dist, jnp.squeeze(contour), jnp.squeeze(diffable)

    __call__ = forward


# ----------------------------------------------------------------------------
# Test
# ----------------------------------------------------------------------------
def _reference(x, dm):
    d = 1.0 / (1.0 + np.exp(-100.0 * (x - 0.1)))
    pad = np.pad(d, ((0, 0), (1, 1), (1, 1)))
    lap = (pad[:, :-2, 1:-1] + pad[:, 2:, 1:-1] +
           pad[:, 1:-1, :-2] + pad[:, 1:-1, 2:] - 4.0 * d)
    lap = np.clip(lap, 0.0, 255.0)
    contour = np.tanh(lap)
    dist = float(np.sum(contour * dm))
    return dist, contour, d


if __name__ == "__main__":
    key = jax.random.PRNGKey(0)
    k1, k2 = jax.random.split(key)

    B, H, W = 2, 64, 128
    img_render_original = jax.random.uniform(k1, (B, H, W), jnp.float32)
    img_ref = (img_render_original > 0.5).astype(jnp.float32)   # unused by the math
    img_ref_dist_map = 10.0 * jax.random.uniform(k2, (B, H, W), jnp.float32)

    module = ContourLoss(device=None)
    dist, contour, diffable = module.forward(
        img_render_original, img_ref, img_ref_dist_map)
    dist = jax.block_until_ready(dist)

    ref_dist, ref_contour, ref_diffable = _reference(
        np.asarray(img_render_original, np.float64),
        np.asarray(img_ref_dist_map, np.float64))

    assert float(dist) >= 0.0
    assert np.allclose(np.asarray(diffable), ref_diffable, rtol=1e-4, atol=1e-4)
    assert np.allclose(np.asarray(contour), ref_contour, rtol=1e-4, atol=1e-4)
    assert np.allclose(float(dist), ref_dist, rtol=1e-3, atol=1e-1), (float(dist), ref_dist)

    print("KERNEL_OK")
</pallas_src>

<mosaic_0001>
module attributes {stable_mosaic.version = 11 : i64} {
  func.func @_contour_loss_kernel(%arg0: i32, %arg1: memref<1x64x128xf32, #tpu.memory_space<vmem>>, %arg2: memref<1x64x128xf32, #tpu.memory_space<vmem>>, %arg3: memref<1x64x128xf32, #tpu.memory_space<vmem>>, %arg4: memref<1x64x128xf32, #tpu.memory_space<vmem>>, %arg5: memref<1x8x128xf32, #tpu.memory_space<vmem>>) attributes {dimension_semantics = [#tpu.dimension_semantics<parallel>], iteration_bounds = array<i64: 2>, scalar_prefetch = 0 : i64, scratch_operands = 0 : i64, tpu.core_type = #tpu.core_type<tc>, window_params = [{transform_indices = @transform_0, window_bounds = array<i64: 1, 64, 128>}, {transform_indices = @transform_1, window_bounds = array<i64: 1, 64, 128>}, {transform_indices = @transform_2, window_bounds = array<i64: 1, 64, 128>}, {transform_indices = @transform_3, window_bounds = array<i64: 1, 64, 128>}, {transform_indices = @transform_4, window_bounds = array<i64: 1, 8, 128>}]} {
    %c0 = arith.constant 0 : index
    %c0_0 = arith.constant 0 : index
    %c0_1 = arith.constant 0 : index
    %0 = vector.load %arg1[%c0, %c0_0, %c0_1] : memref<1x64x128xf32, #tpu.memory_space<vmem>>, vector<1x64x128xf32>
    %1 = vector.shape_cast %0 : vector<1x64x128xf32> to vector<64x128xf32>
    %c0_2 = arith.constant 0 : index
    %c0_3 = arith.constant 0 : index
    %c0_4 = arith.constant 0 : index
    %2 = vector.load %arg2[%c0_2, %c0_3, %c0_4] : memref<1x64x128xf32, #tpu.memory_space<vmem>>, vector<1x64x128xf32>
    %3 = vector.shape_cast %2 : vector<1x64x128xf32> to vector<64x128xf32>
    %cst = arith.constant 1.000000e-01 : f32
    %4 = vector.broadcast %cst : f32 to vector<64x128xf32>
    %5 = arith.subf %1, %4 : vector<64x128xf32>
    %cst_5 = arith.constant -1.000000e+02 : f32
    %6 = vector.broadcast %cst_5 : f32 to vector<64x128xf32>
    %7 = arith.mulf %6, %5 : vector<64x128xf32>
    %8 = math.exp %7 : vector<64x128xf32>
    %cst_6 = arith.constant 1.000000e+00 : f32
    %9 = vector.broadcast %cst_6 : f32 to vector<64x128xf32>
    %10 = arith.addf %9, %8 : vector<64x128xf32>
    %cst_7 = arith.constant 1.000000e+00 : f32
    %11 = vector.broadcast %cst_7 : f32 to vector<64x128xf32>
    %12 = arith.divf %11, %10 : vector<64x128xf32>
    %13 = tpu.iota {dimensions = array<i32: 0>} : vector<64x128xi32>
    %14 = tpu.iota {dimensions = array<i32: 1>} : vector<64x128xi32>
    %c0_i32 = arith.constant 0 : i32
    %15 = vector.broadcast %c0_i32 : i32 to vector<64x128xi32>
    %16 = arith.cmpi eq, %13, %15 : vector<64x128xi32>
    %c1_i32 = arith.constant 1 : i32
    %17 = tpu.dynamic_rotate %12 by %c1_i32 dim 0 : vector<64x128xf32>, i32 -> vector<64x128xf32>
    %cst_8 = arith.constant 0.000000e+00 : f32
    %18 = vector.broadcast %cst_8 : f32 to vector<64x128xf32>
    %19 = arith.select %16, %18, %17 : vector<64x128xi1>, vector<64x128xf32>
    %c63_i32 = arith.constant 63 : i32
    %20 = vector.broadcast %c63_i32 : i32 to vector<64x128xi32>
    %21 = arith.cmpi eq, %13, %20 : vector<64x128xi32>
    %c63_i32_9 = arith.constant 63 : i32
    %22 = tpu.dynamic_rotate %12 by %c63_i32_9 dim 0 : vector<64x128xf32>, i32 -> vector<64x128xf32>
    %cst_10 = arith.constant 0.000000e+00 : f32
    %23 = vector.broadcast %cst_10 : f32 to vector<64x128xf32>
    %24 = arith.select %21, %23, %22 : vector<64x128xi1>, vector<64x128xf32>
    %c0_i32_11 = arith.constant 0 : i32
    %25 = vector.broadcast %c0_i32_11 : i32 to vector<64x128xi32>
    %26 = arith.cmpi eq, %14, %25 : vector<64x128xi32>
    %c1_i32_12 = arith.constant 1 : i32
    %27 = tpu.dynamic_rotate %12 by %c1_i32_12 dim 1 : vector<64x128xf32>, i32 -> vector<64x128xf32>
    %cst_13 = arith.constant 0.000000e+00 : f32
    %28 = vector.broadcast %cst_13 : f32 to vector<64x128xf32>
    %29 = arith.select %26, %28, %27 : vector<64x128xi1>, vector<64x128xf32>
    %c127_i32 = arith.constant 127 : i32
    %30 = vector.broadcast %c127_i32 : i32 to vector<64x128xi32>
    %31 = arith.cmpi eq, %14, %30 : vector<64x128xi32>
    %c127_i32_14 = arith.constant 127 : i32
    %32 = tpu.dynamic_rotate %12 by %c127_i32_14 dim 1 : vector<64x128xf32>, i32 -> vector<64x128xf32>
    %cst_15 = arith.constant 0.000000e+00 : f32
    %33 = vector.broadcast %cst_15 : f32 to vector<64x128xf32>
    %34 = arith.select %31, %33, %32 : vector<64x128xi1>, vector<64x128xf32>
    %35 = arith.addf %19, %24 : vector<64x128xf32>
    %36 = arith.addf %35, %29 : vector<64x128xf32>
    %37 = arith.addf %36, %34 : vector<64x128xf32>
    %cst_16 = arith.constant 4.000000e+00 : f32
    %38 = vector.broadcast %cst_16 : f32 to vector<64x128xf32>
    %39 = arith.mulf %38, %12 : vector<64x128xf32>
    %40 = arith.subf %37, %39 : vector<64x128xf32>
    %cst_17 = arith.constant 0.000000e+00 : f32
    %cst_18 = arith.constant 2.550000e+02 : f32
    %41 = vector.broadcast %cst_17 : f32 to vector<64x128xf32>
    %42 = arith.maximumf %41, %40 : vector<64x128xf32>
    %43 = vector.broadcast %cst_18 : f32 to vector<64x128xf32>
    %44 = arith.minimumf %43, %42 : vector<64x128xf32>
    %45 = math.tanh %44 : vector<64x128xf32>
    %c0_19 = arith.constant 0 : index
    %c0_20 = arith.constant 0 : index
    %c0_21 = arith.constant 0 : index
    %46 = vector.load %arg3[%c0_19, %c0_20, %c0_21] : memref<1x64x128xf32, #tpu.memory_space<vmem>>, vector<1x64x128xf32>
    %47 = vector.shape_cast %46 : vector<1x64x128xf32> to vector<64x128xf32>
    %48 = vector.shape_cast %45 : vector<64x128xf32> to vector<1x64x128xf32>
    tpu.vector_store %arg3[%c0_19, %c0_20, %c0_21], %48 {strides = array<i32>} : memref<1x64x128xf32, #tpu.memory_space<vmem>>, vector<1x64x128xf32>,
    %c0_22 = arith.constant 0 : index
    %c0_23 = arith.constant 0 : index
    %c0_24 = arith.constant 0 : index
    %49 = vector.load %arg4[%c0_22, %c0_23, %c0_24] : memref<1x64x128xf32, #tpu.memory_space<vmem>>, vector<1x64x128xf32>
    %50 = vector.shape_cast %49 : vector<1x64x128xf32> to vector<64x128xf32>
    %51 = vector.shape_cast %12 : vector<64x128xf32> to vector<1x64x128xf32>
    tpu.vector_store %arg4[%c0_22, %c0_23, %c0_24], %51 {strides = array<i32>} : memref<1x64x128xf32, #tpu.memory_space<vmem>>, vector<1x64x128xf32>,
    %52 = arith.mulf %45, %3 : vector<64x128xf32>
    %cst_25 = arith.constant dense<0.000000e+00> : vector<64xf32>
    %53 = vector.multi_reduction <add>, %52, %cst_25 [1] : vector<64x128xf32> to vector<64xf32>
    %54 = vector.shape_cast %53 : vector<64xf32> to vector<64x1xf32>
    %cst_26 = arith.constant dense<0.000000e+00> : vector<1xf32>
    %55 = vector.multi_reduction <add>, %54, %cst_26 [0] : vector<64x1xf32> to vector<1xf32>
    %56 = vector.shape_cast %55 : vector<1xf32> to vector<1x1xf32>
    %57 = vector.shape_cast %56 : vector<1x1xf32> to vector<1x1xf32>
    %58 = vector.broadcast %57 : vector<1x1xf32> to vector<8x128xf32>
    %c0_27 = arith.constant 0 : index
    %c0_28 = arith.constant 0 : index
    %c0_29 = arith.constant 0 : index
    %59 = vector.load %arg5[%c0_27, %c0_28, %c0_29] : memref<1x8x128xf32, #tpu.memory_space<vmem>>, vector<1x8x128xf32>
    %60 = vector.shape_cast %59 : vector<1x8x128xf32> to vector<8x128xf32>
    %61 = vector.shape_cast %58 : vector<8x128xf32> to vector<1x8x128xf32>
    tpu.vector_store %arg5[%c0_27, %c0_28, %c0_29], %61 {strides = array<i32>} : memref<1x8x128xf32, #tpu.memory_space<vmem>>, vector<1x8x128xf32>,
    return
  }
  func.func @transform_0(%arg0: i32) -> (i32, i32, i32) {
    %c0_i32 = arith.constant 0 : i32
    %c0_i32_0 = arith.constant 0 : i32
    %c0_i32_1 = arith.constant 0 : i32
    return %arg0, %c0_i32, %c0_i32_0 : i32, i32, i32
  }
  func.func @transform_1(%arg0: i32) -> (i32, i32, i32) {
    %c0_i32 = arith.constant 0 : i32
    %c0_i32_0 = arith.constant 0 : i32
    %c0_i32_1 = arith.constant 0 : i32
    return %arg0, %c0_i32, %c0_i32_0 : i32, i32, i32
  }
  func.func @transform_2(%arg0: i32) -> (i32, i32, i32) {
    %c0_i32 = arith.constant 0 : i32
    %c0_i32_0 = arith.constant 0 : i32
    %c0_i32_1 = arith.constant 0 : i32
    return %arg0, %c0_i32, %c0_i32_0 : i32, i32, i32
  }
  func.func @transform_3(%arg0: i32) -> (i32, i32, i32) {
    %c0_i32 = arith.constant 0 : i32
    %c0_i32_0 = arith.constant 0 : i32
    %c0_i32_1 = arith.constant 0 : i32
    return %arg0, %c0_i32, %c0_i32_0 : i32, i32, i32
  }
  func.func @transform_4(%arg0: i32) -> (i32, i32, i32) {
    %c0_i32 = arith.constant 0 : i32
    %c0_i32_0 = arith.constant 0 : i32
    %c0_i32_1 = arith.constant 0 : i32
    return %arg0, %c0_i32, %c0_i32_0 : i32, i32, i32
  }
}

</mosaic_0001>

<llo_original>
// kernel: contour_loss_pallas.1
$region0: #{contour_loss_pallas.1}
  #allocation0 [shape = 'u32[]', space=smem, size = 0x4, offset = 0x4, fixed_abs, tag = 'smem constant byte address 0x4 - core index']
  #allocation1 [shape = 'u32[144,128]{1,0:T(1,128)}', space=vmem, size = 0x12000, scoped, tag = 'internal scratch']
  %s0 = inlined_call_operand.hbm [shape: f32[2,64,128], index: 0, kind: input, shape index: {}]
  %s1 = inlined_call_operand.hbm [shape: f32[2,64,128], index: 1, kind: input, shape index: {}]
  %s2 = inlined_call_operand.hbm [shape: f32[2,64,128], index: 2, kind: output, shape index: {0}]
  %s3 = inlined_call_operand.hbm [shape: f32[2,64,128], index: 3, kind: output, shape index: {1}]
  %s4 = inlined_call_operand.vmem [shape: f32[2,8,128], index: 4, kind: output, shape index: {2}]
  %5 = xla_tuple %s2, %s3, %s4
  %s6 = sld [smem:[#allocation0]]
  $region65: #{contour_loss_pallas.1} parent=0
    _
  %s8 = ssub.s32 1, %s6
  %s9 = scalar_select 0, %s8, %s6
  $region1: #{contour_loss_pallas.1} parent=0
    #allocation2 [shape = 'u8[65536]{0}', space=vmem, size = 0x10000, scoped, tag = 'input window, operand 0']
    #allocation3 [shape = 's32[2]{0}', space=sflag, size = 0x8, scoped, tag = 'scoped memory for contour_loss_pallas.1']
    #allocation4 [shape = 's32[2]{0}', space=sflag, size = 0x8, scoped, tag = 'scoped memory for contour_loss_pallas.1']
    #allocation5 [shape = 'u8[65536]{0}', space=vmem, size = 0x10000, scoped, tag = 'input window, operand 1']
    #allocation6 [shape = 's32[2]{0}', space=sflag, size = 0x8, scoped, tag = 'scoped memory for contour_loss_pallas.1']
    #allocation7 [shape = 'u8[65536]{0}', space=vmem, size = 0x10000, scoped, tag = 'output window, operand 0']
    #allocation8 [shape = 'u8[65536]{0}', space=vmem, size = 0x10000, scoped, tag = 'output window, operand 1']
    #allocation9 [shape = 's32[2]{0}', space=sflag, size = 0x8, scoped, tag = 'scoped memory for contour_loss_pallas.1']
    %10 = vsyncpa [#allocation3], 0
    %s11 = scalar_lea.sflag [#allocation3], 1
    %12 = vsyncpa %s11, 0
    %13 = vsyncpa [#allocation6], 0
    %s14 = scalar_lea.sflag [#allocation6], 1
    %15 = vsyncpa %s14, 0
    %16 = vsyncpa [#allocation4], 0
    %s17 = scalar_lea.sflag [#allocation4], 1
    %18 = vsyncpa %s17, 0
    %19 = vsyncpa [#allocation9], 0
    %s20 = scalar_lea.sflag [#allocation9], 1
    %21 = vsyncpa %s20, 0
    loop: start=0, step=1, limit=4
    $region2: #{contour_loss_pallas.1} parent=1 // loop_pre_header
      _
    $region3: #{contour_loss_pallas.1} parent=1 // loop_header
      %s23 = sphi 0, %s27
      %p24 = scmp.ge.s32.totalorder %s23, 4
      %s33 = sphi 0, %s35
      %s36 = sphi 0, %s33
      %s37 = sphi 0, %s36
      %s53 = sphi 0, %s37
      %s59 = sphi 0, %s61
      %s62 = sphi 0, %s59
      %s63 = sphi 0, %s62
      %s79 = sphi 0, %s63
      %s85 = sphi 0, %s87
      %s88 = sphi 0, %s85
      %s89 = sphi 0, %s88
      %s105 = sphi 0, %s89
      %s111 = sphi 0, %s113
      %s114 = sphi 0, %s111
      %s115 = sphi 0, %s114
      %s131 = sphi 0, %s115
      %s137 = sphi 0, %s139
      %s140 = sphi 0, %s137
      %s141 = sphi 0, %s140
      %s157 = sphi 0, %s141
    $region4: #{contour_loss_pallas.1} parent=1 // loop_header_branch
      %26 = sbr.rel (%p24) target = $region8
    $region5: #{contour_loss_pallas.1} parent=1 // loop_body
      %s28 = ssub.s32 %s23, 1
      %s29 = ssub.s32 %s23, 2
      %s30 = sadd.s32 %s23, 1
      %s31 = ssub.s32 %s23, %s30
      %p32 = scmp.eq.s32.totalorder %s31, 0
      %s34 = sadd.s32 %s33, 1
      %s35 = scalar_select %p32, %s33, %s34
      %p38 = pneg %p32
      %p39 = scmp.eq.s32.totalorder %s23, 1
      %p40 = por %p38, %p39
      %p41 = scmp.ne.s32.totalorder %s33, %s36
      %p42 = scmp.eq.s32.totalorder %s23, 0
      %p43 = por %p41, %p42
      %p44 = scmp.ne.s32.totalorder %s33, %s36
      %p45 = scmp.eq.s32.totalorder %s28, 1
      %p46 = por %p44, %p45
      %p47 = scmp.ne.s32.totalorder %s36, %s37
      %p48 = scmp.eq.s32.totalorder %s28, 0
      %p49 = por %p47, %p48
      %p50 = scmp.ne.s32.totalorder %s36, %s37
      %p51 = scmp.eq.s32.totalorder %s29, 1
      %p52 = por %p50, %p51
      %p54 = scmp.ne.s32.totalorder %s37, %s53
      %p55 = scmp.eq.s32.totalorder %s29, 0
      %p56 = por %p54, %p55
      %s57 = ssub.s32 %s23, %s30
      %p58 = scmp.eq.s32.totalorder %s57, 0
      %s60 = sadd.s32 %s59, 1
      %s61 = scalar_select %p58, %s59, %s60
      %p64 = pneg %p58
      %p65 = scmp.eq.s32.totalorder %s23, 1
      %p66 = por %p64, %p65
      %p67 = scmp.ne.s32.totalorder %s59, %s62
      %p68 = scmp.eq.s32.totalorder %s23, 0
      %p69 = por %p67, %p68
      %p70 = scmp.ne.s32.totalorder %s59, %s62
      %p71 = scmp.eq.s32.totalorder %s28, 1
      %p72 = por %p70, %p71
      %p73 = scmp.ne.s32.totalorder %s62, %s63
      %p74 = scmp.eq.s32.totalorder %s28, 0
      %p75 = por %p73, %p74
      %p76 = scmp.ne.s32.totalorder %s62, %s63
      %p77 = scmp.eq.s32.totalorder %s29, 1
      %p78 = por %p76, %p77
      %p80 = scmp.ne.s32.totalorder %s63, %s79
      %p81 = scmp.eq.s32.totalorder %s29, 0
      %p82 = por %p80, %p81
      %s83 = ssub.s32 %s23, %s30
      %p84 = scmp.eq.s32.totalorder %s83, 0
      %s86 = sadd.s32 %s85, 1
      %s87 = scalar_select %p84, %s85, %s86
      %p90 = pneg %p84
      %p91 = scmp.eq.s32.totalorder %s23, 1
      %p92 = por %p90, %p91
      %p93 = scmp.ne.s32.totalorder %s85, %s88
      %p94 = scmp.eq.s32.totalorder %s23, 0
      %p95 = por %p93, %p94
      %p96 = scmp.ne.s32.totalorder %s85, %s88
      %p97 = scmp.eq.s32.totalorder %s28, 1
      %p98 = por %p96, %p97
      %p99 = scmp.ne.s32.totalorder %s88, %s89
      %p100 = scmp.eq.s32.totalorder %s28, 0
      %p101 = por %p99, %p100
      %p102 = scmp.ne.s32.totalorder %s88, %s89
      %p103 = scmp.eq.s32.totalorder %s29, 1
      %p104 = por %p102, %p103
      %p106 = scmp.ne.s32.totalorder %s89, %s105
      %p107 = scmp.eq.s32.totalorder %s29, 0
      %p108 = por %p106, %p107
      %s109 = ssub.s32 %s23, %s30
      %p110 = scmp.eq.s32.totalorder %s109, 0
      %s112 = sadd.s32 %s111, 1
      %s113 = scalar_select %p110, %s111, %s112
      %p116 = pneg %p110
      %p117 = scmp.eq.s32.totalorder %s23, 1
      %p118 = por %p116, %p117
      %p119 = scmp.ne.s32.totalorder %s111, %s114
      %p120 = scmp.eq.s32.totalorder %s23, 0
      %p121 = por %p119, %p120
      %p122 = scmp.ne.s32.totalorder %s111, %s114
      %p123 = scmp.eq.s32.totalorder %s28, 1
      %p124 = por %p122, %p123
      %p125 = scmp.ne.s32.totalorder %s114, %s115
      %p126 = scmp.eq.s32.totalorder %s28, 0
      %p127 = por %p125, %p126
      %p128 = scmp.ne.s32.totalorder %s114, %s115
      %p129 = scmp.eq.s32.totalorder %s29, 1
      %p130 = por %p128, %p129
      %p132 = scmp.ne.s32.totalorder %s115, %s131
      %p133 = scmp.eq.s32.totalorder %s29, 0
      %p134 = por %p132, %p133
      %s135 = ssub.s32 %s23, %s30
      %p136 = scmp.eq.s32.totalorder %s135, 0
      %s138 = sadd.s32 %s137, 1
      %s139 = scalar_select %p136, %s137, %s138
      %p142 = pneg %p136
      %p143 = scmp.eq.s32.totalorder %s23, 1
      %p144 = por %p142, %p143
      %p145 = scmp.ne.s32.totalorder %s137, %s140
      %p146 = scmp.eq.s32.totalorder %s23, 0
      %p147 = por %p145, %p146
      %p148 = scmp.ne.s32.totalorder %s137, %s140
      %p149 = scmp.eq.s32.totalorder %s28, 1
      %p150 = por %p148, %p149
      %p151 = scmp.ne.s32.totalorder %s140, %s141
      %p152 = scmp.eq.s32.totalorder %s28, 0
      %p153 = por %p151, %p152
      %p154 = scmp.ne.s32.totalorder %s140, %s141
      %p155 = scmp.eq.s32.totalorder %s29, 1
      %p156 = por %p154, %p155
      %p158 = scmp.ne.s32.totalorder %s141, %s157
      %p159 = scmp.eq.s32.totalorder %s29, 0
      %p160 = por %p158, %p159
      %p161 = scmp.le.s32.totalorder 1, %s23
      %p162 = scmp.lt.s32.totalorder %s23, 3
      %p163 = pnand %p161, %p162
      %p164 = pneg %p163
      // Predicated region
      $region9: #{contour_loss_pallas.1} parent=5 // pred_check
        _
      $region10: #{contour_loss_pallas.1} parent=5 // pred_check_branch
        %166 = sbr.rel (%p163) target = $region12
      $region11: #{contour_loss_pallas.1} parent=5 // pred_region
        %s167 = ssub.s32 %s23, 1
      $region12: #{contour_loss_pallas.1} parent=5 // pred_fallthru
        _
      %p168 = scmp.lt.s32.totalorder %s23, 2
      // Predicated region
      $region13: #{contour_loss_pallas.1} parent=5 // pred_check
        %p169 = pneg %p168
      $region14: #{contour_loss_pallas.1} parent=5 // pred_check_branch
        %171 = sbr.rel (%p169) target = $region16
      $region15: #{contour_loss_pallas.1} parent=5 // pred_region
        // Predicated region
        $region17: #{contour_loss_pallas.1} parent=15 // pred_check
          %p172 = pneg %p43
        $region18: #{contour_loss_pallas.1} parent=15 // pred_check_branch
          %174 = sbr.rel (%p172) target = $region20
        $region19: #{contour_loss_pallas.1} parent=15 // pred_region
          %s175 = sand.u32 %s33, 1
          %s176 = scalar_lea.sflag [#allocation3], %s175
          %s177 = sand.u32 %s33, 1
          %s178 = smul.addr %s177, 64
          %s179 = scalar_lea.vmem [#allocation2], %s178
          %s181 = ssub.s32 1024, 1024
          %182 = vsyncadd %s176, %s181
          %s183 = smul.addr %s23, 8
          %s184 = smul.addr %s183, 128
          %s185 = scalar_lea.hbm %s0, %s184
          %s186 = sshll.u32 %s179, 4
          %s187 = int_to_ptr.vmem [resolvable:$true] %s186
          %192 = dma.hbm_to_vmem [thread:$0]  %s185, 1024, %s187, %s176, 128, 128, 8
        $region20: #{contour_loss_pallas.1} parent=15 // pred_fallthru
          _
        // Predicated region
        $region21: #{contour_loss_pallas.1} parent=15 // pred_check
          %p193 = pneg %p69
        $region22: #{contour_loss_pallas.1} parent=15 // pred_check_branch
          %195 = sbr.rel (%p193) target = $region24
        $region23: #{contour_loss_pallas.1} parent=15 // pred_region
          %s196 = sand.u32 %s59, 1
          %s197 = scalar_lea.sflag [#allocation6], %s196
          %s198 = sand.u32 %s59, 1
          %s199 = smul.addr %s198, 64
          %s200 = scalar_lea.vmem [#allocation5], %s199
          %s202 = ssub.s32 1024, 1024
          %203 = vsyncadd %s197, %s202
          %s204 = smul.addr %s23, 8
          %s205 = smul.addr %s204, 128
          %s206 = scalar_lea.hbm %s1, %s205
          %s207 = sshll.u32 %s200, 4
          %s208 = int_to_ptr.vmem [resolvable:$true] %s207
          %213 = dma.hbm_to_vmem [thread:$0]  %s206, 1024, %s208, %s197, 128, 128, 8
        $region24: #{contour_loss_pallas.1} parent=15 // pred_fallthru
          _
      $region16: #{contour_loss_pallas.1} parent=5 // pred_fallthru
        _
      %p214 = scmp.le.s32.totalorder 1, %s23
      %p215 = scmp.lt.s32.totalorder %s23, 3
      %p216 = pnand %p214, %p215
      %p217 = pneg %p216
      // Predicated region
      $region25: #{contour_loss_pallas.1} parent=5 // pred_check
        _
      $region26: #{contour_loss_pallas.1} parent=5 // pred_check_branch
        %219 = sbr.rel (%p216) target = $region28
      $region27: #{contour_loss_pallas.1} parent=5 // pred_region
        %s220 = ssub.s32 %s23, 1
        %s221 = sand.u32 %s36, 1
        %s222 = scalar_lea.sflag [#allocation3], %s221
        %s223 = sand.u32 %s36, 1
        %s224 = smul.addr %s223, 64
        %s225 = scalar_lea.vmem [#allocation2], %s224
        // Predicated region
        $region29: #{contour_loss_pallas.1} parent=27 // pred_check
          %p226 = pneg %p49
        $region30: #{contour_loss_pallas.1} parent=27 // pred_check_branch
          %228 = sbr.rel (%p226) target = $region32
        $region31: #{contour_loss_pallas.1} parent=27 // pred_region
          %229 = dma.done %s222, 1024
        $region32: #{contour_loss_pallas.1} parent=27 // pred_fallthru
          _
        %s230 = sand.u32 %s62, 1
        %s231 = scalar_lea.sflag [#allocation6], %s230
        %s232 = sand.u32 %s62, 1
        %s233 = smul.addr %s232, 64
        %s234 = scalar_lea.vmem [#allocation5], %s233
        // Predicated region
        $region33: #{contour_loss_pallas.1} parent=27 // pred_check
          %p235 = pneg %p75
        $region34: #{contour_loss_pallas.1} parent=27 // pred_check_branch
          %237 = sbr.rel (%p235) target = $region36
        $region35: #{contour_loss_pallas.1} parent=27 // pred_region
          %238 = dma.done %s231, 1024
        $region36: #{contour_loss_pallas.1} parent=27 // pred_fallthru
          _
        %s239 = sand.u32 %s36, 1
        %s240 = scalar_lea.sflag [#allocation3], %s239
        %s241 = sand.u32 %s36, 1
        %s242 = smul.addr %s241, 64
        %s243 = scalar_lea.vmem [#allocation2], %s242
        %p244 = pneg %p49
        %p245 = pneg %p46
        %s246 = sand.u32 %s62, 1
        %s247 = scalar_lea.sflag [#allocation6], %s246
        %s248 = sand.u32 %s62, 1
        %s249 = smul.addr %s248, 64
        %s250 = scalar_lea.vmem [#allocation5], %s249
        %p251 = pneg %p75
        %p252 = pneg %p72
        %p253 = pneg %p101
        %p254 = pneg %p98
        %s255 = sand.u32 %s88, 1
        %s256 = scalar_lea.sflag [#allocation4], %s255
        %s257 = sand.u32 %s88, 1
        %s258 = smul.addr %s257, 64
        %s259 = scalar_lea.vmem [#allocation7], %s258
        %p260 = pneg %p127
        %p261 = pneg %p124
        %s262 = sand.u32 %s114, 1
        %s263 = scalar_lea.sflag [#allocation9], %s262
        %s264 = sand.u32 %s114, 1
        %s265 = smul.addr %s264, 64
        %s266 = scalar_lea.vmem [#allocation8], %s265
        %p267 = pneg %p153
        %p268 = pneg %p150
        %p269 = scmp.lt.s32.totalorder %s28, 1
        %s270 = scalar_select %p269, %s28, 1
        %s271 = smul.addr %s270, 8
        %s272 = scalar_lea.vmem %s4, %s271
        %p273 = scmp.lt.s32.totalorder %s28, 1
        %s274 = scalar_select %p273, %s28, 1
        %s275 = smul.addr %s274, 8
        %s276 = scalar_lea.vmem %s4, %s275
        %v277 = vld [vmem:[%s225] sm:$0xff]
        %v278 = vld [vmem:[%s225 + $0x8] sm:$0xff]
        %v279 = vld [vmem:[%s225 + $0x10] sm:$0xff]
        %v280 = vld [vmem:[%s225 + $0x18] sm:$0xff]
        %v281 = vld [vmem:[%s225 + $0x20] sm:$0xff]
        %v282 = vld [vmem:[%s225 + $0x28] sm:$0xff]
        %v283 = vld [vmem:[%s225 + $0x30] sm:$0xff]
        %v284 = vld [vmem:[%s225 + $0x38] sm:$0xff]
        %v285 = vld [vmem:[%s234] sm:$0xff]
        %v286 = vld [vmem:[%s234 + $0x8] sm:$0xff]
        %v287 = vld [vmem:[%s234 + $0x10] sm:$0xff]
        %v288 = vld [vmem:[%s234 + $0x18] sm:$0xff]
        %v289 = vld [vmem:[%s234 + $0x20] sm:$0xff]
        %v290 = vld [vmem:[%s234 + $0x28] sm:$0xff]
        %v291 = vld [vmem:[%s234 + $0x30] sm:$0xff]
        %v292 = vld [vmem:[%s234 + $0x38] sm:$0xff]
        %v293 = vsub.f32 %v277, 0.1
        %v294 = vsub.f32 %v278, 0.1
        %v295 = vsub.f32 %v279, 0.1
        %v296 = vsub.f32 %v280, 0.1
        %v297 = vsub.f32 %v281, 0.1
        %v298 = vsub.f32 %v282, 0.1
        %v299 = vsub.f32 %v283, 0.1
        %v300 = vsub.f32 %v284, 0.1
        %v301 = vmul.f32 %v293, -100.0
        %v302 = vmul.f32 %v294, -100.0
        %v303 = vmul.f32 %v295, -100.0
        %v304 = vmul.f32 %v296, -100.0
        %v305 = vmul.f32 %v297, -100.0
        %v306 = vmul.f32 %v298, -100.0
        %v307 = vmul.f32 %v299, -100.0
        %v308 = vmul.f32 %v300, -100.0
        %v309 = vmul.f32 %v301, 1.442695
        %v310 = vpow.pop %v309
        %v311 = vmul.f32 %v302, 1.442695
        %v312 = vpow.pop %v311
        %v313 = vmul.f32 %v303, 1.442695
        %v314 = vpow.pop %v313
        %v315 = vmul.f32 %v304, 1.442695
        %v316 = vpow.pop %v315
        %v317 = vmul.f32 %v305, 1.442695
        %v318 = vpow.pop %v317
        %v319 = vmul.f32 %v306, 1.442695
        %v320 = vpow.pop %v319
        %v321 = vmul.f32 %v307, 1.442695
        %v322 = vpow.pop %v321
        %v323 = vmul.f32 %v308, 1.442695
        %v324 = vpow.pop %v323
        %v325 = vadd.f32 %v310, 1.0
        %v326 = vadd.f32 %v312, 1.0
        %v327 = vadd.f32 %v314, 1.0
        %v328 = vadd.f32 %v316, 1.0
        %v329 = vadd.f32 %v318, 1.0
        %v330 = vadd.f32 %v320, 1.0
        %v331 = vadd.f32 %v322, 1.0
        %v332 = vadd.f32 %v324, 1.0
        %v333 = vrcp.pop %v325
        %v334 = vmul.f32 1.0, %v333
        %v335 = vrcp.pop %v326
        %v336 = vmul.f32 1.0, %v335
        %v337 = vrcp.pop %v327
        %v338 = vmul.f32 1.0, %v337
        %v339 = vrcp.pop %v328
        %v340 = vmul.f32 1.0, %v339
        %v341 = vrcp.pop %v329
        %v342 = vmul.f32 1.0, %v341
        %v343 = vrcp.pop %v330
        %v344 = vmul.f32 1.0, %v343
        %v345 = vrcp.pop %v331
        %v346 = vmul.f32 1.0, %v345
        %v347 = vrcp.pop %v332
        %v348 = vmul.f32 1.0, %v347
        %v349 = vlaneseq
        %v350 = vshrl.u32 %v349, 7
        %v351 = vadd.s32 %v350, 8
        %v352 = vadd.s32 %v350, 16
        %v353 = vadd.s32 %v350, 24
        %v354 = vadd.s32 %v350, 32
        %v355 = vadd.s32 %v350, 40
        %v356 = vadd.s32 %v350, 48
        %v357 = vadd.s32 %v350, 56
        %v358 = vlaneseq
        %v359 = vand.u32 %v358, 127
        %vm360 = vcmp.eq.s32.totalorder %v350, 0
        %vm361 = vcmp.eq.s32.totalorder %v351, 0
        %vm362 = vcmp.eq.s32.totalorder %v352, 0
        %vm363 = vcmp.eq.s32.totalorder %v353, 0
        %vm364 = vcmp.eq.s32.totalorder %v354, 0
        %vm365 = vcmp.eq.s32.totalorder %v355, 0
        %vm366 = vcmp.eq.s32.totalorder %v356, 0
        %vm367 = vcmp.eq.s32.totalorder %v357, 0
        %v368 = vrot.slane %v334, 7
        %v369 = vrot.slane %v336, 7
        %v370 = vrot.slane %v338, 7
        %v371 = vrot.slane %v340, 7
        %v372 = vrot.slane %v342, 7
        %v373 = vrot.slane %v344, 7
        %v374 = vrot.slane %v346, 7
        %v375 = vrot.slane %v348, 7
        %vm376 = vcmp.lt.s32.totalorder %v350, 1
        %v377 = vsel %vm376, %v374, %v375
        %v378 = vsel %vm376, %v373, %v374
        %v379 = vsel %vm376, %v372, %v373
        %v380 = vsel %vm376, %v371, %v372
        %v381 = vsel %vm376, %v370, %v371
        %v382 = vsel %vm376, %v369, %v370
        %v383 = vsel %vm376, %v368, %v369
        %v384 = vsel %vm376, %v375, %v368
        %v385 = vsel %vm360, 0.0, %v384
        %v386 = vsel %vm361, 0.0, %v383
        %v387 = vsel %vm362, 0.0, %v382
        %v388 = vsel %vm363, 0.0, %v381
        %v389 = vsel %vm364, 0.0, %v380
        %v390 = vsel %vm365, 0.0, %v379
        %v391 = vsel %vm366, 0.0, %v378
        %v392 = vsel %vm367, 0.0, %v377
        %vm393 = vcmp.eq.s32.totalorder %v350, 63
        %vm394 = vcmp.eq.s32.totalorder %v351, 63
        %vm395 = vcmp.eq.s32.totalorder %v352, 63
        %vm396 = vcmp.eq.s32.totalorder %v353, 63
        %vm397 = vcmp.eq.s32.totalorder %v354, 63
        %vm398 = vcmp.eq.s32.totalorder %v355, 63
        %vm399 = vcmp.eq.s32.totalorder %v356, 63
        %vm400 = vcmp.eq.s32.totalorder %v357, 63
        %v401 = vrot.slane %v334, 1
        %v402 = vrot.slane %v336, 1
        %v403 = vrot.slane %v338, 1
        %v404 = vrot.slane %v340, 1
        %v405 = vrot.slane %v342, 1
        %v406 = vrot.slane %v344, 1
        %v407 = vrot.slane %v346, 1
        %v408 = vrot.slane %v348, 1
        %vm409 = vcmp.lt.s32.totalorder %v350, 7
        %v410 = vsel %vm409, %v407, %v408
        %v411 = vsel %vm409, %v406, %v407
        %v412 = vsel %vm409, %v405, %v406
        %v413 = vsel %vm409, %v404, %v405
        %v414 = vsel %vm409, %v403, %v404
        %v415 = vsel %vm409, %v402, %v403
        %v416 = vsel %vm409, %v401, %v402
        %v417 = vsel %vm409, %v408, %v401
        %v418 = vsel %vm393, 0.0, %v416
        %v419 = vsel %vm394, 0.0, %v415
        %v420 = vsel %vm395, 0.0, %v414
        %v421 = vsel %vm396, 0.0, %v413
        %v422 = vsel %vm397, 0.0, %v412
        %v423 = vsel %vm398, 0.0, %v411
        %v424 = vsel %vm399, 0.0, %v410
        %v425 = vsel %vm400, 0.0, %v417
        %vm426 = vcmp.eq.s32.totalorder %v359, 0
        %427 = vrot.lane.b32.xlu0 %v334, 1
        %v428 = vpop.permute.xlu0 %427
        %429 = vrot.lane.b32.xlu0 %v336, 1
        %v430 = vpop.permute.xlu0 %429
        %431 = vrot.lane.b32.xlu0 %v338, 1
        %v432 = vpop.permute.xlu0 %431
        %433 = vrot.lane.b32.xlu0 %v340, 1
        %v434 = vpop.permute.xlu0 %433
        %435 = vrot.lane.b32.xlu0 %v342, 1
        %v436 = vpop.permute.xlu0 %435
        %437 = vrot.lane.b32.xlu0 %v344, 1
        %v438 = vpop.permute.xlu0 %437
        %439 = vrot.lane.b32.xlu0 %v346, 1
        %v440 = vpop.permute.xlu0 %439
        %441 = vrot.lane.b32.xlu0 %v348, 1
        %v442 = vpop.permute.xlu0 %441
        %v443 = vsel %vm426, 0.0, %v428
        %v444 = vsel %vm426, 0.0, %v430
        %v445 = vsel %vm426, 0.0, %v432
        %v446 = vsel %vm426, 0.0, %v434
        %v447 = vsel %vm426, 0.0, %v436
        %v448 = vsel %vm426, 0.0, %v438
        %v449 = vsel %vm426, 0.0, %v440
        %v450 = vsel %vm426, 0.0, %v442
        %vm451 = vcmp.eq.s32.totalorder %v359, 127
        %452 = vrot.lane.b32.xlu0 %v334, 127
        %v453 = vpop.permute.xlu0 %452
        %454 = vrot.lane.b32.xlu0 %v336, 127
        %v455 = vpop.permute.xlu0 %454
        %456 = vrot.lane.b32.xlu0 %v338, 127
        %v457 = vpop.permute.xlu0 %456
        %458 = vrot.lane.b32.xlu0 %v340, 127
        %v459 = vpop.permute.xlu0 %458
        %460 = vrot.lane.b32.xlu0 %v342, 127
        %v461 = vpop.permute.xlu0 %460
        %462 = vrot.lane.b32.xlu0 %v344, 127
        %v463 = vpop.permute.xlu0 %462
        %464 = vrot.lane.b32.xlu0 %v346, 127
        %v465 = vpop.permute.xlu0 %464
        %466 = vrot.lane.b32.xlu0 %v348, 127
        %v467 = vpop.permute.xlu0 %466
        %v468 = vsel %vm451, 0.0, %v453
        %v469 = vsel %vm451, 0.0, %v455
        %v470 = vsel %vm451, 0.0, %v457
        %v471 = vsel %vm451, 0.0, %v459
        %v472 = vsel %vm451, 0.0, %v461
        %v473 = vsel %vm451, 0.0, %v463
        %v474 = vsel %vm451, 0.0, %v465
        %v475 = vsel %vm451, 0.0, %v467
        %v476 = vadd.f32 %v385, %v418
        %v477 = vadd.f32 %v386, %v419
        %v478 = vadd.f32 %v387, %v420
        %v479 = vadd.f32 %v388, %v421
        %v480 = vadd.f32 %v389, %v422
        %v481 = vadd.f32 %v390, %v423
        %v482 = vadd.f32 %v391, %v424
        %v483 = vadd.f32 %v392, %v425
        %v484 = vadd.f32 %v476, %v443
        %v485 = vadd.f32 %v477, %v444
        %v486 = vadd.f32 %v478, %v445
        %v487 = vadd.f32 %v479, %v446
        %v488 = vadd.f32 %v480, %v447
        %v489 = vadd.f32 %v481, %v448
        %v490 = vadd.f32 %v482, %v449
        %v491 = vadd.f32 %v483, %v450
        %v492 = vadd.f32 %v484, %v468
        %v493 = vadd.f32 %v485, %v469
        %v494 = vadd.f32 %v486, %v470
        %v495 = vadd.f32 %v487, %v471
        %v496 = vadd.f32 %v488, %v472
        %v497 = vadd.f32 %v489, %v473
        %v498 = vadd.f32 %v490, %v474
        %v499 = vadd.f32 %v491, %v475
        %v500 = vmul.f32 %v334, 4.0
        %v501 = vmul.f32 %v336, 4.0
        %v502 = vmul.f32 %v338, 4.0
        %v503 = vmul.f32 %v340, 4.0
        %v504 = vmul.f32 %v342, 4.0
        %v505 = vmul.f32 %v344, 4.0
        %v506 = vmul.f32 %v346, 4.0
        %v507 = vmul.f32 %v348, 4.0
        %v508 = vsub.f32 %v492, %v500
        %v509 = vsub.f32 %v493, %v501
        %v510 = vsub.f32 %v494, %v502
        %v511 = vsub.f32 %v495, %v503
        %v512 = vsub.f32 %v496, %v504
        %v513 = vsub.f32 %v497, %v505
        %v514 = vsub.f32 %v498, %v506
        %v515 = vsub.f32 %v499, %v507
        %v516 = vmax.f32 %v508, 0.0
        %v517 = vmax.f32 %v509, 0.0
        %v518 = vmax.f32 %v510, 0.0
        %v519 = vmax.f32 %v511, 0.0
        %v520 = vmax.f32 %v512, 0.0
        %v521 = vmax.f32 %v513, 0.0
        %v522 = vmax.f32 %v514, 0.0
        %v523 = vmax.f32 %v515, 0.0
        %v524 = vmin.f32 %v516, 255.0
        %v525 = vmin.f32 %v517, 255.0
        %v526 = vmin.f32 %v518, 255.0
        %v527 = vmin.f32 %v519, 255.0
        %v528 = vmin.f32 %v520, 255.0
        %v529 = vmin.f32 %v521, 255.0
        %v530 = vmin.f32 %v522, 255.0
        %v531 = vmin.f32 %v523, 255.0
        %v532 = vtanh.pop %v524
        %v533 = vtanh.pop %v525
        %v534 = vtanh.pop %v526
        %v535 = vtanh.pop %v527
        %v536 = vtanh.pop %v528
        %v537 = vtanh.pop %v529
        %v538 = vtanh.pop %v530
        %v539 = vtanh.pop %v531
        %540 = vst [vmem:[%s259] sm:$0xff] %v532
        %541 = vst [vmem:[%s259 + $0x8] sm:$0xff] %v533
        %542 = vst [vmem:[%s259 + $0x10] sm:$0xff] %v534
        %543 = vst [vmem:[%s259 + $0x18] sm:$0xff] %v535
        %544 = vst [vmem:[%s259 + $0x20] sm:$0xff] %v536
        %545 = vst [vmem:[%s259 + $0x28] sm:$0xff] %v537
        %546 = vst [vmem:[%s259 + $0x30] sm:$0xff] %v538
        %547 = vst [vmem:[%s259 + $0x38] sm:$0xff] %v539
        %548 = vst [vmem:[%s266] sm:$0xff] %v334
        %549 = vst [vmem:[%s266 + $0x8] sm:$0xff] %v336
        %550 = vst [vmem:[%s266 + $0x10] sm:$0xff] %v338
        %551 = vst [vmem:[%s266 + $0x18] sm:$0xff] %v340
        %552 = vst [vmem:[%s266 + $0x20] sm:$0xff] %v342
        %553 = vst [vmem:[%s266 + $0x28] sm:$0xff] %v344
        %554 = vst [vmem:[%s266 + $0x30] sm:$0xff] %v346
        %555 = vst [vmem:[%s266 + $0x38] sm:$0xff] %v348
        %v556 = vmul.f32 %v532, %v285
        %v557 = vmul.f32 %v533, %v286
        %v558 = vmul.f32 %v534, %v287
        %v559 = vmul.f32 %v535, %v288
        %v560 = vmul.f32 %v536, %v289
        %v561 = vmul.f32 %v537, %v290
        %v562 = vmul.f32 %v538, %v291
        %v563 = vmul.f32 %v539, %v292
        %564 = vadd.xlane.f32.xlu0 %v556
        %v565 = vpop.xlane.xlu0 %564
        %566 = vadd.xlane.f32.xlu0 %v557
        %v567 = vpop.xlane.xlu0 %566
        %568 = vadd.xlane.f32.xlu0 %v558
        %v569 = vpop.xlane.xlu0 %568
        %570 = vadd.xlane.f32.xlu0 %v559
        %v571 = vpop.xlane.xlu0 %570
        %572 = vadd.xlane.f32.xlu0 %v560
        %v573 = vpop.xlane.xlu0 %572
        %574 = vadd.xlane.f32.xlu0 %v561
        %v575 = vpop.xlane.xlu0 %574
        %576 = vadd.xlane.f32.xlu0 %v562
        %v577 = vpop.xlane.xlu0 %576
        %578 = vadd.xlane.f32.xlu0 %v563
        %v579 = vpop.xlane.xlu0 %578
        %v580 = vadd.f32 %v565, %v567
        %v581 = vadd.f32 %v580, %v569
        %v582 = vadd.f32 %v581, %v571
        %v583 = vadd.f32 %v582, %v573
        %v584 = vadd.f32 %v583, %v575
        %v585 = vadd.f32 %v584, %v577
        %v586 = vadd.f32 %v585, %v579
        %v587 = vrot.slane %v586, 4
        %v588 = vadd.f32 %v586, %v587
        %v589 = vrot.slane %v588, 2
        %v590 = vadd.f32 %v588, %v589
        %v591 = vrot.slane %v590, 1
        %v592 = vadd.f32 %v590, %v591
        %593 = vst [vmem:[%s276] sm:$0xff] %v592
        %s594 = sand.u32 %s88, 1
        %s595 = scalar_lea.sflag [#allocation4], %s594
        %s596 = sand.u32 %s88, 1
        %s597 = smul.addr %s596, 64
        %s598 = scalar_lea.vmem [#allocation7], %s597
        %s599 = sand.u32 %s114, 1
        %s600 = scalar_lea.sflag [#allocation9], %s599
        %s601 = sand.u32 %s114, 1
        %s602 = smul.addr %s601, 64
        %s603 = scalar_lea.vmem [#allocation8], %s602
        %p604 = scmp.lt.s32.totalorder %s28, 1
        %s605 = scalar_select %p604, %s28, 1
        %s606 = smul.addr %s605, 8
        %s607 = scalar_lea.vmem %s4, %s606
        // Predicated region
        $region37: #{contour_loss_pallas.1} parent=27 // pred_check
          %p608 = pneg %p98
        $region38: #{contour_loss_pallas.1} parent=27 // pred_check_branch
          %610 = sbr.rel (%p608) target = $region40
        $region39: #{contour_loss_pallas.1} parent=27 // pred_region
          %s612 = ssub.s32 1024, 1024
          %613 = vsyncadd %s595, %s612
          %s614 = smul.addr %s28, 8
          %s615 = smul.addr %s614, 128
          %s616 = scalar_lea.hbm %s2, %s615
          %s617 = sshll.u32 %s598, 4
          %s618 = int_to_ptr.vmem [resolvable:$true] %s617
          %623 = dma.vmem_to_hbm [thread:$0]  %s618, 1024, %s616, %s595, 128, 128, 8
        $region40: #{contour_loss_pallas.1} parent=27 // pred_fallthru
          _
        // Predicated region
        $region41: #{contour_loss_pallas.1} parent=27 // pred_check
          %p624 = pneg %p124
        $region42: #{contour_loss_pallas.1} parent=27 // pred_check_branch
          %626 = sbr.rel (%p624) target = $region44
        $region43: #{contour_loss_pallas.1} parent=27 // pred_region
          %s628 = ssub.s32 1024, 1024
          %629 = vsyncadd %s600, %s628
          %s630 = smul.addr %s28, 8
          %s631 = smul.addr %s630, 128
          %s632 = scalar_lea.hbm %s3, %s631
          %s633 = sshll.u32 %s603, 4
          %s634 = int_to_ptr.vmem [resolvable:$true] %s633
          %639 = dma.vmem_to_hbm [thread:$0]  %s634, 1024, %s632, %s600, 128, 128, 8
        $region44: #{contour_loss_pallas.1} parent=27 // pred_fallthru
          _
        // Predicated region
        $region45: #{contour_loss_pallas.1} parent=27 // pred_check
          %p640 = pneg %p150
        $region46: #{contour_loss_pallas.1} parent=27 // pred_check_branch
          %642 = sbr.rel (%p640) target = $region48
        $region47: #{contour_loss_pallas.1} parent=27 // pred_region
          _
        $region48: #{contour_loss_pallas.1} parent=27 // pred_fallthru
          _
      $region28: #{contour_loss_pallas.1} parent=5 // pred_fallthru
        _
      %p643 = scmp.le.s32.totalorder 2, %s23
      // Predicated region
      $region49: #{contour_loss_pallas.1} parent=5 // pred_check
        %p644 = pneg %p643
      $region50: #{contour_loss_pallas.1} parent=5 // pred_check_branch
        %646 = sbr.rel (%p644) target = $region52
      $region51: #{contour_loss_pallas.1} parent=5 // pred_region
        %s647 = ssub.s32 %s23, 2
        // Predicated region
        $region53: #{contour_loss_pallas.1} parent=51 // pred_check
          %p648 = pneg %p104
        $region54: #{contour_loss_pallas.1} parent=51 // pred_check_branch
          %650 = sbr.rel (%p648) target = $region56
        $region55: #{contour_loss_pallas.1} parent=51 // pred_region
          %s651 = sand.u32 %s89, 1
          %s652 = scalar_lea.sflag [#allocation4], %s651
          %s653 = sand.u32 %s89, 1
          %s654 = smul.addr %s653, 64
          %s655 = scalar_lea.vmem [#allocation7], %s654
          %656 = dma.done %s652, 1024
        $region56: #{contour_loss_pallas.1} parent=51 // pred_fallthru
          _
        // Predicated region
        $region57: #{contour_loss_pallas.1} parent=51 // pred_check
          %p657 = pneg %p130
        $region58: #{contour_loss_pallas.1} parent=51 // pred_check_branch
          %659 = sbr.rel (%p657) target = $region60
        $region59: #{contour_loss_pallas.1} parent=51 // pred_region
          %s660 = sand.u32 %s115, 1
          %s661 = scalar_lea.sflag [#allocation9], %s660
          %s662 = sand.u32 %s115, 1
          %s663 = smul.addr %s662, 64
          %s664 = scalar_lea.vmem [#allocation8], %s663
          %665 = dma.done %s661, 1024
        $region60: #{contour_loss_pallas.1} parent=51 // pred_fallthru
          _
        // Predicated region
        $region61: #{contour_loss_pallas.1} parent=51 // pred_check
          %p666 = pneg %p156
        $region62: #{contour_loss_pallas.1} parent=51 // pred_check_branch
          %668 = sbr.rel (%p666) target = $region64
        $region63: #{contour_loss_pallas.1} parent=51 // pred_region
          %p669 = scmp.lt.s32.totalorder %s29, 1
          %s670 = scalar_select %p669, %s29, 1
          %s671 = smul.addr %s670, 8
          %s672 = scalar_lea.vmem %s4, %s671
        $region64: #{contour_loss_pallas.1} parent=51 // pred_fallthru
          _
      $region52: #{contour_loss_pallas.1} parent=5 // pred_fallthru
        _
    $region6: #{contour_loss_pallas.1} parent=1 // loop_footer
      %s27 = sadd.s32 1, %s23
    $region7: #{contour_loss_pallas.1} parent=1 // loop_footer_branch
      %22 = sbr.rel target = $region3
    $region8: #{contour_loss_pallas.1} parent=1 // loop_exit
      _
    %673 = vsyncpa [#allocation3], 1
    %s674 = scalar_lea.sflag [#allocation3], 1
    %675 = vsyncpa %s674, 1
    %676 = vsyncpa [#allocation6], 1
    %s677 = scalar_lea.sflag [#allocation6], 1
    %678 = vsyncpa %s677, 1
    %679 = vsyncpa [#allocation4], 1
    %s680 = scalar_lea.sflag [#allocation4], 1
    %681 = vsyncpa %s680, 1
    %682 = vsyncpa [#allocation9], 1
    %s683 = scalar_lea.sflag [#allocation9], 1
    %684 = vsyncpa %s683, 1

</llo_original>
